<compile_context>
chip_gen: v5e
topology: v5e:2x2
jax: 0.10.0
libtpu: 0.0.40
codegen_flags: <defaults>
</compile_context>

<pallas_src>
import jax
import jax.numpy as jnp
import numpy as np
from jax.experimental import pallas as pl
from jax.experimental.pallas import tpu as pltpu

# constants hard-coded in the PyTorch module's __init__
_MEAN = (0.485, 0.456, 0.406)
_STD = (0.229, 0.224, 0.225)
OUT_DIM = 64
GROUP = OUT_DIM // 6          # 10
KSIZE = 7
K2 = KSIZE * KSIZE            # 49
PAD_CH = OUT_DIM - 6 * GROUP  # 4 zero channels
N_ROWS = 3 * (2 * GROUP + 1)  # 63 fused rows: per channel [10 fx | 10 fy | 1 avg]
K_DIM = 3 * K2                # 147 contracting dim (3 channels x 49 taps)
TN_MAX = 2048                 # pixel tile on the lane axis


def _round_up(a, b):
    return -(-a // b) * b


def _crconv_kernel(p_ref, w_ref, b_ref, o_ref):
    # p_ref: (147, TN) raw im2col patches, pixels on lanes (pad positions hold mean_c)
    # w_ref: (63, 147) block-diagonal fused weights (normalization folded in)
    # b_ref: (63, 1)   per-row bias (= -mean_c * rowsum(w/std_c); 0 for avg rows)
    # o_ref: (64, TN)  lane-dense output
    acc = jnp.dot(w_ref[...], p_ref[...],
                  preferred_element_type=jnp.float32) + b_ref[...]        # (63, TN)

    convx = [acc[c * 21:c * 21 + GROUP, :] for c in range(3)]             # F.conv2d(ch, filter_x)
    convy = [acc[c * 21 + GROUP:c * 21 + 2 * GROUP, :] for c in range(3)] # F.conv2d(ch, filter_y)
    avg = [acc[c * 21 + 2 * GROUP:c * 21 + 2 * GROUP + 1, :]              # avg_pool2d(raw, 2, 2)
           for c in range(3)]

    for k, (i, j) in enumerate(((0, 1), (0, 2), (1, 2))):
        aij = avg[i] * avg[j]
        dx = convx[i] * avg[j] - convx[j] * avg[i]
        dy = convy[i] * avg[j] - convy[j] * avg[i]
        mx = dx * pl.reciprocal(aij + jnp.abs(dx) + 0.01, approx=True)
        my = dy * pl.reciprocal(aij + jnp.abs(dy) + 0.01, approx=True)
        o_ref[pl.ds(k * GROUP, GROUP), :] = jnp.clip(mx, -2.0, 2.0)
        o_ref[pl.ds((3 + k) * GROUP, GROUP), :] = jnp.clip(my, -2.0, 2.0)

    o_ref[pl.ds(6 * GROUP, PAD_CH), :] = jnp.zeros(
        (PAD_CH, o_ref.shape[1]), o_ref.dtype)


def make_filters(key):
    """learnable_filters + the filter construction done in forward()."""
    k1, k2 = jax.random.split(key)
    fxh = jax.random.normal(k1, (GROUP, 1, KSIZE, KSIZE // 2), jnp.float32)
    fyh = jax.random.normal(k2, (GROUP, 1, KSIZE // 2, KSIZE), jnp.float32)
    fx = jnp.concatenate([-jnp.abs(fxh),
                          jnp.zeros((GROUP, 1, KSIZE, 1), jnp.float32),
                          jnp.flip(jnp.abs(fxh), axis=3)], axis=3)      # (10,1,7,7)
    fy = jnp.concatenate([-jnp.abs(fyh),
                          jnp.zeros((GROUP, 1, 1, KSIZE), jnp.float32),
                          jnp.flip(jnp.abs(fyh), axis=2)], axis=2)      # (10,1,7,7)
    return fx, fy


def _build_weights(fx, fy):
    """Block-diagonal (63,147) weight with normalization folded in, plus bias."""
    wx = fx.reshape(GROUP, K2)                                          # tap index = p*7+q
    wy = fy.reshape(GROUP, K2)
    pool_idx = jnp.array([3 * KSIZE + 3, 3 * KSIZE + 4,
                          4 * KSIZE + 3, 4 * KSIZE + 4])
    wa = jnp.zeros((1, K2), jnp.float32).at[0, pool_idx].set(0.25)      # 2x2 avg-pool taps

    wmat = jnp.zeros((N_ROWS, K_DIM), jnp.float32)
    bias = jnp.zeros((N_ROWS, 1), jnp.float32)
    for c in range(3):
        # conv rows act on raw pixels: scale by 1/std_c, bias by -mean_c*rowsum
        w_conv = jnp.concatenate([wx, wy], axis=0) / _STD[c]            # (20,49)
        w_c = jnp.concatenate([w_conv, wa], axis=0)                     # (21,49)
        wmat = wmat.at[c * 21:(c + 1) * 21, c * K2:(c + 1) * K2].set(w_c)
        b_c = -_MEAN[c] * jnp.sum(w_conv, axis=1, keepdims=True)        # (20,1)
        bias = bias.at[c * 21:c * 21 + 2 * GROUP, :].set(b_c)
    return wmat, bias


@jax.jit
def crconv2d_forward(x, fx, fy):
    B, C, H, W = x.shape
    assert C == 3 and H % 2 == 0 and W % 2 == 0
    h, w = H // 2, W // 2
    N = B * h * w

    mean = jnp.array(_MEAN, x.dtype).reshape(1, 3, 1, 1)
    # Pad the raw image with per-channel mean so the normalization folded into
    # the weights sees exact zeros at padded positions (matching torch's
    # zero-padding of the *normalized* image inside F.conv2d(padding=3)).
    xpad = jnp.pad(x - mean, ((0, 0), (0, 0), (3, 3), (3, 3))) + mean

    # TODO(synk): im2col (49 taps) is still materialized wrapper-side by XLA;
    # an in-kernel halo-band DMA im2col would cut the dominant HBM traffic further.
    slabs = [xpad[:, :, p:p + 2 * h:2, q:q + 2 * w:2]
             for p in range(KSIZE) for q in range(KSIZE)]               # each (B,3,h,w)
    patches = jnp.stack(slabs, axis=0)                                  # (49,B,3,h,w)
    patches = jnp.transpose(patches, (2, 0, 1, 3, 4)).reshape(K_DIM, N) # (147,N), pixels on lanes

    TN = min(TN_MAX, _round_up(N, 128))
    Np = _round_up(N, TN)
    if Np != N:
        patches = jnp.pad(patches, ((0, 0), (0, Np - N)))

    wmat, bias = _build_weights(fx, fy)

    out_flat = pl.pallas_call(
        _crconv_kernel,
        out_shape=jax.ShapeDtypeStruct((OUT_DIM, Np), jnp.float32),
        grid_spec=pltpu.PrefetchScalarGridSpec(
            num_scalar_prefetch=0,
            grid=(Np // TN,),
            in_specs=[pl.BlockSpec((K_DIM, TN), lambda n: (0, n)),
                      pl.BlockSpec((N_ROWS, K_DIM), lambda n: (0, 0)),
                      pl.BlockSpec((N_ROWS, 1), lambda n: (0, 0))],
            out_specs=pl.BlockSpec((OUT_DIM, TN), lambda n: (0, n)),
        ),
        compiler_params=pltpu.CompilerParams(
            dimension_semantics=("parallel",),
            vmem_limit_bytes=48 * 1024 * 1024),
    )(patches, wmat, bias)

    out = out_flat[:, :N].reshape(OUT_DIM, B, h, w)
    return jnp.transpose(out, (1, 0, 2, 3))                             # (B,64,h,w)


def reference_forward(x, fx, fy):
    """Pure-JAX reference mirroring the PyTorch forward (learn_filter=True)."""
    mean = jnp.array(_MEAN, jnp.float32).reshape(1, 3, 1, 1)
    std = jnp.array(_STD, jnp.float32).reshape(1, 3, 1, 1)
    xn = (x - mean) / std
    pooled = jax.lax.reduce_window(x, 0.0, jax.lax.add,
                                   (1, 1, 2, 2), (1, 1, 2, 2), 'VALID') * 0.25
    ch = [pooled[:, c:c + 1] for c in range(3)]

    def conv(inp, wgt):
        return jax.lax.conv_general_dilated(
            inp, wgt, window_strides=(2, 2), padding=[(3, 3), (3, 3)],
            dimension_numbers=('NCHW', 'OIHW', 'NCHW'))

    chx = [conv(xn[:, c:c + 1], fx) for c in range(3)]
    chy = [conv(xn[:, c:c + 1], fy) for c in range(3)]
    mx, my = [], []
    for i, j in ((0, 1), (0, 2), (1, 2)):
        dx = chx[i] * ch[j] - chx[j] * ch[i]
        dy = chy[i] * ch[j] - chy[j] * ch[i]
        mx.append(dx / (ch[i] * ch[j] + jnp.abs(dx) + 0.01))
        my.append(dy / (ch[i] * ch[j] + jnp.abs(dy) + 0.01))
    out = jnp.clip(jnp.concatenate(mx + my, axis=1), -2.0, 2.0)
    rem = jnp.zeros((out.shape[0], PAD_CH, out.shape[2], out.shape[3]))
    return jnp.concatenate([out, rem], axis=1)


if __name__ == "__main__":
    key = jax.random.PRNGKey(0)
    k_in, k_filt = jax.random.split(key)
    # image-like input in [0, 1), NCHW
    x = jax.random.uniform(k_in, (2, 3, 16, 16), jnp.float32)
    fx, fy = make_filters(k_filt)

    out = jax.block_until_ready(crconv2d_forward(x, fx, fy))
    assert out.shape == (2, 64, 8, 8), out.shape

    ref = jax.block_until_ready(reference_forward(x, fx, fy))
    np.testing.assert_allclose(np.asarray(out), np.asarray(ref), atol=5e-3, rtol=5e-3)

    print("KERNEL_OK")
</pallas_src>

<mosaic_0001>
module attributes {stable_mosaic.version = 11 : i64} {
  func.func @_crconv_kernel(%arg0: i32, %arg1: memref<147x128xf32, #tpu.memory_space<vmem>>, %arg2: memref<63x147xf32, #tpu.memory_space<vmem>>, %arg3: memref<63x1xf32, #tpu.memory_space<vmem>>, %arg4: memref<64x128xf32, #tpu.memory_space<vmem>>) attributes {dimension_semantics = [#tpu.dimension_semantics<parallel>], iteration_bounds = array<i64: 1>, scalar_prefetch = 0 : i64, scratch_operands = 0 : i64, tpu.core_type = #tpu.core_type<tc>, window_params = [{transform_indices = @transform_0, window_bounds = array<i64: 147, 128>}, {pipeline_mode = #tpu.pipeline_mode<synchronous>, transform_indices = @transform_1, window_bounds = array<i64: 63, 147>}, {pipeline_mode = #tpu.pipeline_mode<synchronous>, transform_indices = @transform_2, window_bounds = array<i64: 63, 1>}, {transform_indices = @transform_3, window_bounds = array<i64: 64, 128>}]} {
    %c0 = arith.constant 0 : index
    %c0_0 = arith.constant 0 : index
    %0 = vector.load %arg2[%c0, %c0_0] : memref<63x147xf32, #tpu.memory_space<vmem>>, vector<63x147xf32>
    %c0_1 = arith.constant 0 : index
    %c0_2 = arith.constant 0 : index
    %1 = vector.load %arg1[%c0_1, %c0_2] : memref<147x128xf32, #tpu.memory_space<vmem>>, vector<147x128xf32>
    %cst = arith.constant dense<0.000000e+00> : vector<63x128xf32>
    %2 = tpu.matmul %0, %1, %cst {dimension_numbers = #tpu.dot_dimension_numbers<[1], [0], [0], [1], [0, 0, 1, 1], [], []>} : vector<63x147xf32>, vector<147x128xf32>, vector<63x128xf32> -> vector<63x128xf32>
    %c0_3 = arith.constant 0 : index
    %c0_4 = arith.constant 0 : index
    %3 = vector.load %arg3[%c0_3, %c0_4] : memref<63x1xf32, #tpu.memory_space<vmem>>, vector<63x1xf32>
    %4 = vector.broadcast %3 : vector<63x1xf32> to vector<63x128xf32>
    %5 = arith.addf %2, %4 : vector<63x128xf32>
    %6 = vector.extract_strided_slice %5 {offsets = [0, 0], sizes = [10, 128], strides = [1, 1]} : vector<63x128xf32> to vector<10x128xf32>
    %7 = vector.extract_strided_slice %5 {offsets = [21, 0], sizes = [10, 128], strides = [1, 1]} : vector<63x128xf32> to vector<10x128xf32>
    %8 = vector.extract_strided_slice %5 {offsets = [42, 0], sizes = [10, 128], strides = [1, 1]} : vector<63x128xf32> to vector<10x128xf32>
    %9 = vector.extract_strided_slice %5 {offsets = [10, 0], sizes = [10, 128], strides = [1, 1]} : vector<63x128xf32> to vector<10x128xf32>
    %10 = vector.extract_strided_slice %5 {offsets = [31, 0], sizes = [10, 128], strides = [1, 1]} : vector<63x128xf32> to vector<10x128xf32>
    %11 = vector.extract_strided_slice %5 {offsets = [52, 0], sizes = [10, 128], strides = [1, 1]} : vector<63x128xf32> to vector<10x128xf32>
    %12 = vector.extract_strided_slice %5 {offsets = [20, 0], sizes = [1, 128], strides = [1, 1]} : vector<63x128xf32> to vector<1x128xf32>
    %13 = vector.extract_strided_slice %5 {offsets = [41, 0], sizes = [1, 128], strides = [1, 1]} : vector<63x128xf32> to vector<1x128xf32>
    %14 = vector.extract_strided_slice %5 {offsets = [62, 0], sizes = [1, 128], strides = [1, 1]} : vector<63x128xf32> to vector<1x128xf32>
    %15 = arith.mulf %12, %13 : vector<1x128xf32>
    %16 = vector.broadcast %13 : vector<1x128xf32> to vector<10x128xf32>
    %17 = arith.mulf %6, %16 : vector<10x128xf32>
    %18 = vector.broadcast %12 : vector<1x128xf32> to vector<10x128xf32>
    %19 = arith.mulf %7, %18 : vector<10x128xf32>
    %20 = arith.subf %17, %19 : vector<10x128xf32>
    %21 = vector.broadcast %13 : vector<1x128xf32> to vector<10x128xf32>
    %22 = arith.mulf %9, %21 : vector<10x128xf32>
    %23 = vector.broadcast %12 : vector<1x128xf32> to vector<10x128xf32>
    %24 = arith.mulf %10, %23 : vector<10x128xf32>
    %25 = arith.subf %22, %24 : vector<10x128xf32>
    %26 = math.absf %20 : vector<10x128xf32>
    %27 = vector.broadcast %15 : vector<1x128xf32> to vector<10x128xf32>
    %28 = arith.addf %27, %26 : vector<10x128xf32>
    %cst_5 = arith.constant 0.00999999977 : f32
    %29 = vector.broadcast %cst_5 : f32 to vector<10x128xf32>
    %30 = arith.addf %28, %29 : vector<10x128xf32>
    %31 = tpu.reciprocal %30 {approx = true} : vector<10x128xf32> -> vector<10x128xf32>
    %32 = arith.mulf %20, %31 : vector<10x128xf32>
    %33 = math.absf %25 : vector<10x128xf32>
    %34 = vector.broadcast %15 : vector<1x128xf32> to vector<10x128xf32>
    %35 = arith.addf %34, %33 : vector<10x128xf32>
    %cst_6 = arith.constant 0.00999999977 : f32
    %36 = vector.broadcast %cst_6 : f32 to vector<10x128xf32>
    %37 = arith.addf %35, %36 : vector<10x128xf32>
    %38 = tpu.reciprocal %37 {approx = true} : vector<10x128xf32> -> vector<10x128xf32>
    %39 = arith.mulf %25, %38 : vector<10x128xf32>
    %cst_7 = arith.constant -2.000000e+00 : f32
    %cst_8 = arith.constant 2.000000e+00 : f32
    %40 = vector.broadcast %cst_7 : f32 to vector<10x128xf32>
    %41 = arith.maximumf %40, %32 : vector<10x128xf32>
    %42 = vector.broadcast %cst_8 : f32 to vector<10x128xf32>
    %43 = arith.minimumf %42, %41 : vector<10x128xf32>
    %c0_9 = arith.constant 0 : index
    %c0_10 = arith.constant 0 : index
    %44 = vector.load %arg4[%c0_9, %c0_10] : memref<64x128xf32, #tpu.memory_space<vmem>>, vector<10x128xf32>
    tpu.vector_store %arg4[%c0_9, %c0_10], %43 {strides = array<i32>} : memref<64x128xf32, #tpu.memory_space<vmem>>, vector<10x128xf32>,
    %cst_11 = arith.constant -2.000000e+00 : f32
    %cst_12 = arith.constant 2.000000e+00 : f32
    %45 = vector.broadcast %cst_11 : f32 to vector<10x128xf32>
    %46 = arith.maximumf %45, %39 : vector<10x128xf32>
    %47 = vector.broadcast %cst_12 : f32 to vector<10x128xf32>
    %48 = arith.minimumf %47, %46 : vector<10x128xf32>
    %c30 = arith.constant 30 : index
    %c0_13 = arith.constant 0 : index
    %49 = vector.load %arg4[%c30, %c0_13] : memref<64x128xf32, #tpu.memory_space<vmem>>, vector<10x128xf32>
    tpu.vector_store %arg4[%c30, %c0_13], %48 {strides = array<i32>} : memref<64x128xf32, #tpu.memory_space<vmem>>, vector<10x128xf32>,
    %50 = arith.mulf %12, %14 : vector<1x128xf32>
    %51 = vector.broadcast %14 : vector<1x128xf32> to vector<10x128xf32>
    %52 = arith.mulf %6, %51 : vector<10x128xf32>
    %53 = vector.broadcast %12 : vector<1x128xf32> to vector<10x128xf32>
    %54 = arith.mulf %8, %53 : vector<10x128xf32>
    %55 = arith.subf %52, %54 : vector<10x128xf32>
    %56 = vector.broadcast %14 : vector<1x128xf32> to vector<10x128xf32>
    %57 = arith.mulf %9, %56 : vector<10x128xf32>
    %58 = vector.broadcast %12 : vector<1x128xf32> to vector<10x128xf32>
    %59 = arith.mulf %11, %58 : vector<10x128xf32>
    %60 = arith.subf %57, %59 : vector<10x128xf32>
    %61 = math.absf %55 : vector<10x128xf32>
    %62 = vector.broadcast %50 : vector<1x128xf32> to vector<10x128xf32>
    %63 = arith.addf %62, %61 : vector<10x128xf32>
    %cst_14 = arith.constant 0.00999999977 : f32
    %64 = vector.broadcast %cst_14 : f32 to vector<10x128xf32>
    %65 = arith.addf %63, %64 : vector<10x128xf32>
    %66 = tpu.reciprocal %65 {approx = true} : vector<10x128xf32> -> vector<10x128xf32>
    %67 = arith.mulf %55, %66 : vector<10x128xf32>
    %68 = math.absf %60 : vector<10x128xf32>
    %69 = vector.broadcast %50 : vector<1x128xf32> to vector<10x128xf32>
    %70 = arith.addf %69, %68 : vector<10x128xf32>
    %cst_15 = arith.constant 0.00999999977 : f32
    %71 = vector.broadcast %cst_15 : f32 to vector<10x128xf32>
    %72 = arith.addf %70, %71 : vector<10x128xf32>
    %73 = tpu.reciprocal %72 {approx = true} : vector<10x128xf32> -> vector<10x128xf32>
    %74 = arith.mulf %60, %73 : vector<10x128xf32>
    %cst_16 = arith.constant -2.000000e+00 : f32
    %cst_17 = arith.constant 2.000000e+00 : f32
    %75 = vector.broadcast %cst_16 : f32 to vector<10x128xf32>
    %76 = arith.maximumf %75, %67 : vector<10x128xf32>
    %77 = vector.broadcast %cst_17 : f32 to vector<10x128xf32>
    %78 = arith.minimumf %77, %76 : vector<10x128xf32>
    %c10 = arith.constant 10 : index
    %c0_18 = arith.constant 0 : index
    %79 = vector.load %arg4[%c10, %c0_18] : memref<64x128xf32, #tpu.memory_space<vmem>>, vector<10x128xf32>
    tpu.vector_store %arg4[%c10, %c0_18], %78 {strides = array<i32>} : memref<64x128xf32, #tpu.memory_space<vmem>>, vector<10x128xf32>,
    %cst_19 = arith.constant -2.000000e+00 : f32
    %cst_20 = arith.constant 2.000000e+00 : f32
    %80 = vector.broadcast %cst_19 : f32 to vector<10x128xf32>
    %81 = arith.maximumf %80, %74 : vector<10x128xf32>
    %82 = vector.broadcast %cst_20 : f32 to vector<10x128xf32>
    %83 = arith.minimumf %82, %81 : vector<10x128xf32>
    %c40 = arith.constant 40 : index
    %c0_21 = arith.constant 0 : index
    %84 = vector.load %arg4[%c40, %c0_21] : memref<64x128xf32, #tpu.memory_space<vmem>>, vector<10x128xf32>
    tpu.vector_store %arg4[%c40, %c0_21], %83 {strides = array<i32>} : memref<64x128xf32, #tpu.memory_space<vmem>>, vector<10x128xf32>,
    %85 = arith.mulf %13, %14 : vector<1x128xf32>
    %86 = vector.broadcast %14 : vector<1x128xf32> to vector<10x128xf32>
    %87 = arith.mulf %7, %86 : vector<10x128xf32>
    %88 = vector.broadcast %13 : vector<1x128xf32> to vector<10x128xf32>
    %89 = arith.mulf %8, %88 : vector<10x128xf32>
    %90 = arith.subf %87, %89 : vector<10x128xf32>
    %91 = vector.broadcast %14 : vector<1x128xf32> to vector<10x128xf32>
    %92 = arith.mulf %10, %91 : vector<10x128xf32>
    %93 = vector.broadcast %13 : vector<1x128xf32> to vector<10x128xf32>
    %94 = arith.mulf %11, %93 : vector<10x128xf32>
    %95 = arith.subf %92, %94 : vector<10x128xf32>
    %96 = math.absf %90 : vector<10x128xf32>
    %97 = vector.broadcast %85 : vector<1x128xf32> to vector<10x128xf32>
    %98 = arith.addf %97, %96 : vector<10x128xf32>
    %cst_22 = arith.constant 0.00999999977 : f32
    %99 = vector.broadcast %cst_22 : f32 to vector<10x128xf32>
    %100 = arith.addf %98, %99 : vector<10x128xf32>
    %101 = tpu.reciprocal %100 {approx = true} : vector<10x128xf32> -> vector<10x128xf32>
    %102 = arith.mulf %90, %101 : vector<10x128xf32>
    %103 = math.absf %95 : vector<10x128xf32>
    %104 = vector.broadcast %85 : vector<1x128xf32> to vector<10x128xf32>
    %105 = arith.addf %104, %103 : vector<10x128xf32>
    %cst_23 = arith.constant 0.00999999977 : f32
    %106 = vector.broadcast %cst_23 : f32 to vector<10x128xf32>
    %107 = arith.addf %105, %106 : vector<10x128xf32>
    %108 = tpu.reciprocal %107 {approx = true} : vector<10x128xf32> -> vector<10x128xf32>
    %109 = arith.mulf %95, %108 : vector<10x128xf32>
    %cst_24 = arith.constant -2.000000e+00 : f32
    %cst_25 = arith.constant 2.000000e+00 : f32
    %110 = vector.broadcast %cst_24 : f32 to vector<10x128xf32>
    %111 = arith.maximumf %110, %102 : vector<10x128xf32>
    %112 = vector.broadcast %cst_25 : f32 to vector<10x128xf32>
    %113 = arith.minimumf %112, %111 : vector<10x128xf32>
    %c20 = arith.constant 20 : index
    %c0_26 = arith.constant 0 : index
    %114 = vector.load %arg4[%c20, %c0_26] : memref<64x128xf32, #tpu.memory_space<vmem>>, vector<10x128xf32>
    tpu.vector_store %arg4[%c20, %c0_26], %113 {strides = array<i32>} : memref<64x128xf32, #tpu.memory_space<vmem>>, vector<10x128xf32>,
    %cst_27 = arith.constant -2.000000e+00 : f32
    %cst_28 = arith.constant 2.000000e+00 : f32
    %115 = vector.broadcast %cst_27 : f32 to vector<10x128xf32>
    %116 = arith.maximumf %115, %109 : vector<10x128xf32>
    %117 = vector.broadcast %cst_28 : f32 to vector<10x128xf32>
    %118 = arith.minimumf %117, %116 : vector<10x128xf32>
    %c50 = arith.constant 50 : index
    %c0_29 = arith.constant 0 : index
    %119 = vector.load %arg4[%c50, %c0_29] : memref<64x128xf32, #tpu.memory_space<vmem>>, vector<10x128xf32>
    tpu.vector_store %arg4[%c50, %c0_29], %118 {strides = array<i32>} : memref<64x128xf32, #tpu.memory_space<vmem>>, vector<10x128xf32>,
    %cst_30 = arith.constant 0.000000e+00 : f32
    %120 = vector.broadcast %cst_30 : f32 to vector<4x128xf32>
    %c60 = arith.constant 60 : index
    %c0_31 = arith.constant 0 : index
    %121 = vector.load %arg4[%c60, %c0_31] : memref<64x128xf32, #tpu.memory_space<vmem>>, vector<4x128xf32>
    tpu.vector_store %arg4[%c60, %c0_31], %120 {strides = array<i32>} : memref<64x128xf32, #tpu.memory_space<vmem>>, vector<4x128xf32>,
    return
  }
  func.func @transform_0(%arg0: i32) -> (i32, i32) {
    %c0_i32 = arith.constant 0 : i32
    %c0_i32_0 = arith.constant 0 : i32
    return %c0_i32, %arg0 : i32, i32
  }
  func.func @transform_1(%arg0: i32) -> (i32, i32) {
    %c0_i32 = arith.constant 0 : i32
    %c0_i32_0 = arith.constant 0 : i32
    %c0_i32_1 = arith.constant 0 : i32
    return %c0_i32, %c0_i32_0 : i32, i32
  }
  func.func @transform_2(%arg0: i32) -> (i32, i32) {
    %c0_i32 = arith.constant 0 : i32
    %c0_i32_0 = arith.constant 0 : i32
    %c0_i32_1 = arith.constant 0 : i32
    return %c0_i32, %c0_i32_0 : i32, i32
  }
  func.func @transform_3(%arg0: i32) -> (i32, i32) {
    %c0_i32 = arith.constant 0 : i32
    %c0_i32_0 = arith.constant 0 : i32
    return %c0_i32, %arg0 : i32, i32
  }
}

</mosaic_0001>

<llo_original>
// kernel: crconv2d_forward.1
$region0: #{crconv2d_forward.1}
  #allocation0 [shape = 'u32[]', space=smem, size = 0x4, offset = 0x4, fixed_abs, tag = 'smem constant byte address 0x4 - core index']
  #allocation1 [shape = 'u32[72,128]{1,0:T(1,128)}', space=vmem, size = 0x9000, scoped, tag = 'internal scratch']
  %s0 = inlined_call_operand.vmem [shape: f32[147,128], index: 0, kind: input, shape index: {}]
  %s1 = inlined_call_operand.vmem [shape: f32[63,147], index: 1, kind: input, shape index: {}]
  %s2 = inlined_call_operand.vmem [shape: f32[63,1], index: 2, kind: input, shape index: {}]
  %s3 = inlined_call_operand.vmem [shape: f32[64,128], index: 3, kind: output, shape index: {}]
  %s4 = sld [smem:[#allocation0]]
  $region22: #{crconv2d_forward.1} parent=0
    _
  %s6 = ssub.s32 1, %s4
  %s7 = scalar_select 0, %s6, %s4
  // Predicated region
  $region2: #{crconv2d_forward.1} parent=0 // pred_check
    _
  $region3: #{crconv2d_forward.1} parent=0 // pred_check_branch
    %9 = sbr.rel (0) target = $region5
  $region4: #{crconv2d_forward.1} parent=0 // pred_region
    _
  $region5: #{crconv2d_forward.1} parent=0 // pred_fallthru
    _
  // Predicated region
  $region6: #{crconv2d_forward.1} parent=0 // pred_check
    _
  $region7: #{crconv2d_forward.1} parent=0 // pred_check_branch
    %11 = sbr.rel (0) target = $region9
  $region8: #{crconv2d_forward.1} parent=0 // pred_region
    _
  $region9: #{crconv2d_forward.1} parent=0 // pred_fallthru
    _
  // Predicated region
  $region10: #{crconv2d_forward.1} parent=0 // pred_check
    _
  $region11: #{crconv2d_forward.1} parent=0 // pred_check_branch
    %13 = sbr.rel (0) target = $region13
  $region12: #{crconv2d_forward.1} parent=0 // pred_region
    _
  $region13: #{crconv2d_forward.1} parent=0 // pred_fallthru
    _
  %v14 = vld [vmem:[%s1] sm:$0xff]
  %v15 = vld [vmem:[%s1 + $0x8] sm:$0xff]
  %v16 = vld [vmem:[%s1 + $0x10] sm:$0xff]
  %v17 = vld [vmem:[%s1 + $0x18] sm:$0xff]
  %v18 = vld [vmem:[%s1 + $0x20] sm:$0xff]
  %v19 = vld [vmem:[%s1 + $0x28] sm:$0xff]
  %v20 = vld [vmem:[%s1 + $0x30] sm:$0xff]
  %v21 = vld [vmem:[%s1 + $0x38] sm:$0xff]
  %v22 = vld [vmem:[%s1 + $0x40] sm:$0xff]
  %v23 = vld [vmem:[%s1 + $0x48] sm:$0xff]
  %v24 = vld [vmem:[%s1 + $0x50] sm:$0xff]
  %v25 = vld [vmem:[%s1 + $0x58] sm:$0xff]
  %v26 = vld [vmem:[%s1 + $0x60] sm:$0xff]
  %v27 = vld [vmem:[%s1 + $0x68] sm:$0xff]
  %v28 = vld [vmem:[%s1 + $0x70] sm:$0x7f]
  %v29 = vld [vmem:[%s1 + $0x78] sm:$0x7f]
  %v30 = vld [vmem:[%s0] sm:$0xff]
  %v31 = vld [vmem:[%s0 + $0x8] sm:$0xff]
  %v32 = vld [vmem:[%s0 + $0x10] sm:$0xff]
  %v33 = vld [vmem:[%s0 + $0x18] sm:$0xff]
  %v34 = vld [vmem:[%s0 + $0x20] sm:$0xff]
  %v35 = vld [vmem:[%s0 + $0x28] sm:$0xff]
  %v36 = vld [vmem:[%s0 + $0x30] sm:$0xff]
  %v37 = vld [vmem:[%s0 + $0x38] sm:$0xff]
  %v38 = vld [vmem:[%s0 + $0x40] sm:$0xff]
  %v39 = vld [vmem:[%s0 + $0x48] sm:$0xff]
  %v40 = vld [vmem:[%s0 + $0x50] sm:$0xff]
  %v41 = vld [vmem:[%s0 + $0x58] sm:$0xff]
  %v42 = vld [vmem:[%s0 + $0x60] sm:$0xff]
  %v43 = vld [vmem:[%s0 + $0x68] sm:$0xff]
  %v44 = vld [vmem:[%s0 + $0x70] sm:$0xff]
  %v45 = vld [vmem:[%s0 + $0x78] sm:$0xff]
  %v46 = vld [vmem:[%s0 + $0x80] sm:$0xff]
  %v47 = vld [vmem:[%s0 + $0x88] sm:$0xff]
  %v48 = vld [vmem:[%s0 + $0x90] sm:$0x7]
  %v49 = vld [vmem:[%s2] sm:$0xff]
  %v50 = vld [vmem:[%s2 + $0x8] sm:$0xff]
  %v51 = vld [vmem:[%s2 + $0x10] sm:$0xff]
  %v52 = vld [vmem:[%s2 + $0x18] sm:$0xff]
  %v53 = vld [vmem:[%s2 + $0x20] sm:$0xff]
  %v54 = vld [vmem:[%s2 + $0x28] sm:$0xff]
  %v55 = vld [vmem:[%s2 + $0x30] sm:$0xff]
  %v56 = vld [vmem:[%s2 + $0x38] sm:$0x7f]
  %58 = vset.pattern.permute.xlu0 0
  %59 = vperm.xlu0 %58, %v49
  %v60 = vpop.permute.xlu0 %59
  %63 = vset.pattern.permute.xlu0 0
  %64 = vperm.xlu0 %63, %v50
  %v65 = vpop.permute.xlu0 %64
  %68 = vset.pattern.permute.xlu0 0
  %69 = vperm.xlu0 %68, %v51
  %v70 = vpop.permute.xlu0 %69
  %73 = vset.pattern.permute.xlu0 0
  %74 = vperm.xlu0 %73, %v52
  %v75 = vpop.permute.xlu0 %74
  %78 = vset.pattern.permute.xlu0 0
  %79 = vperm.xlu0 %78, %v53
  %v80 = vpop.permute.xlu0 %79
  %83 = vset.pattern.permute.xlu0 0
  %84 = vperm.xlu0 %83, %v54
  %v85 = vpop.permute.xlu0 %84
  %88 = vset.pattern.permute.xlu0 0
  %89 = vperm.xlu0 %88, %v55
  %v90 = vpop.permute.xlu0 %89
  %93 = vset.pattern.permute.xlu0 0
  %94 = vperm.xlu0 %93, %v56
  %v95 = vpop.permute.xlu0 %94
  %vm97 = vcmask 154624
  %v99 = vsel %vm97, %v15, 0
  %v102 = vsel %vm97, %v17, 0
  %v105 = vsel %vm97, %v19, 0
  %v108 = vsel %vm97, %v21, 0
  %v111 = vsel %vm97, %v23, 0
  %v114 = vsel %vm97, %v25, 0
  %v117 = vsel %vm97, %v27, 0
  %v120 = vsel %vm97, %v29, 0
  %vm122 = vcmask 1042432
  %v124 = vsel %vm122, %v48, 0
  %126 = vmatpush.msra.mxu0 %v45
  %127 = vmatpush.msra.mxu0 %v44
  %128 = vmatpush.msra.mxu0 %v43
  %129 = vmatpush.msra.mxu0 %v42
  %130 = vmatpush.msra.mxu0 %v41
  %131 = vmatpush.msra.mxu0 %v40
  %132 = vmatpush.msra.mxu0 %v39
  %133 = vmatpush.msra.mxu0 %v38
  %134 = vmatpush.msra.mxu0 %v37
  %135 = vmatpush.msra.mxu0 %v36
  %136 = vmatpush.msra.mxu0 %v35
  %137 = vmatpush.msra.mxu0 %v34
  %138 = vmatpush.msra.mxu0 %v33
  %139 = vmatpush.msra.mxu0 %v32
  %140 = vmatpush.msra.mxu0 %v31
  %141 = vmatpush.msra.mxu0 %v30
  %142 = vmatmul.f32.gmra.mxu0 %v14
  %v143 = vpop.f32.mrf.mxu0
  %v144 = vadd.f32 %v60, %v143
  %145 = vmatmul.f32.gmra.mxu0 %v16
  %v146 = vpop.f32.mrf.mxu0
  %v147 = vadd.f32 %v65, %v146
  %148 = vmatmul.f32.gmra.mxu0 %v18
  %v149 = vpop.f32.mrf.mxu0
  %v150 = vadd.f32 %v70, %v149
  %151 = vmatmul.f32.gmra.mxu0 %v20
  %v152 = vpop.f32.mrf.mxu0
  %v153 = vadd.f32 %v75, %v152
  %154 = vmatmul.f32.gmra.mxu0 %v22
  %v155 = vpop.f32.mrf.mxu0
  %v156 = vadd.f32 %v80, %v155
  %157 = vmatmul.f32.gmra.mxu0 %v24
  %v158 = vpop.f32.mrf.mxu0
  %v159 = vadd.f32 %v85, %v158
  %160 = vmatmul.f32.gmra.mxu0 %v26
  %v161 = vpop.f32.mrf.mxu0
  %v162 = vadd.f32 %v90, %v161
  %163 = vmatmul.f32.gmra.mxu0 %v28
  %v164 = vpop.f32.mrf.mxu0
  %v165 = vadd.f32 %v95, %v164
  %166 = vdwg.mxu0
  %167 = vmatpush.msra.mxu0 0.0
  %168 = vmatpush.msra.mxu0 0.0
  %169 = vmatpush.msra.mxu0 0.0
  %170 = vmatpush.msra.mxu0 0.0
  %171 = vmatpush.msra.mxu0 0.0
  %172 = vmatpush.msra.mxu0 0.0
  %173 = vmatpush.msra.mxu0 0.0
  %174 = vmatpush.msra.mxu0 0.0
  %175 = vmatpush.msra.mxu0 0.0
  %176 = vmatpush.msra.mxu0 0.0
  %177 = vmatpush.msra.mxu0 0.0
  %178 = vmatpush.msra.mxu0 0.0
  %179 = vmatpush.msra.mxu0 0.0
  %180 = vmatpush.msra.mxu0 %v124
  %181 = vmatpush.msra.mxu0 %v47
  %182 = vmatpush.msra.mxu0 %v46
  %183 = vmatmul.f32.gmra.mxu0 %v99
  %v184 = vpop.f32.mrf.mxu0
  %v185 = vadd.f32 %v144, %v184
  %186 = vmatmul.f32.gmra.mxu0 %v102
  %v187 = vpop.f32.mrf.mxu0
  %v188 = vadd.f32 %v147, %v187
  %189 = vmatmul.f32.gmra.mxu0 %v105
  %v190 = vpop.f32.mrf.mxu0
  %v191 = vadd.f32 %v150, %v190
  %192 = vmatmul.f32.gmra.mxu0 %v108
  %v193 = vpop.f32.mrf.mxu0
  %v194 = vadd.f32 %v153, %v193
  %195 = vmatmul.f32.gmra.mxu0 %v111
  %v196 = vpop.f32.mrf.mxu0
  %v197 = vadd.f32 %v156, %v196
  %198 = vmatmul.f32.gmra.mxu0 %v114
  %v199 = vpop.f32.mrf.mxu0
  %v200 = vadd.f32 %v159, %v199
  %201 = vmatmul.f32.gmra.mxu0 %v117
  %v202 = vpop.f32.mrf.mxu0
  %v203 = vadd.f32 %v162, %v202
  %204 = vmatmul.f32.gmra.mxu0 %v120
  %v205 = vpop.f32.mrf.mxu0
  %v206 = vadd.f32 %v165, %v205
  %207 = vdwg.mxu0
  %v209 = vrot.slane %v200, 5
  %v211 = vmul.f32 %v191, %v209
  %v212 = vperm.slane %v200, 1
  %v213 = vmul.f32 %v185, %v212
  %v214 = vmul.f32 %v188, %v212
  %v215 = vperm.slane %v191, 4
  %v216 = vmul.f32 %v191, %v215
  %v217 = vmul.f32 %v194, %v215
  %v220 = vrot.slane %v216, 5
  %v221 = vrot.slane %v217, 5
  %v222 = vsel %vm122, %v220, %v221
  %v225 = vsub.f32 %v213, %v222
  %v226 = vsub.f32 %v214, %v221
  %v227 = vmul.f32 %v191, %v212
  %v228 = vmul.f32 %v197, %v215
  %v229 = vmul.f32 %v200, %v215
  %v232 = vrot.slane %v228, 5
  %v233 = vsel %vm122, %v221, %v232
  %v234 = vrot.slane %v229, 5
  %v235 = vsel %vm122, %v232, %v234
  %v238 = vsub.f32 %v214, %v233
  %v239 = vsub.f32 %v227, %v235
  %v240 = vand.u32 2147483647, %v225
  %v241 = vand.u32 2147483647, %v226
  %v242 = vperm.slane %v211, 4
  %v243 = vadd.f32 %v242, %v240
  %v244 = vadd.f32 %v242, %v241
  %v245 = vadd.f32 %v243, 0.01
  %v246 = vadd.f32 %v244, 0.01
  %v247 = vrcp.pop %v245
  %v248 = vrcp.pop %v246
  %v249 = vmul.f32 %v225, %v247
  %v250 = vmul.f32 %v226, %v248
  %v251 = vand.u32 2147483647, %v238
  %v252 = vand.u32 2147483647, %v239
  %v253 = vadd.f32 %v242, %v251
  %v254 = vadd.f32 %v242, %v252
  %v255 = vadd.f32 %v253, 0.01
  %v256 = vadd.f32 %v254, 0.01
  %v257 = vrcp.pop %v255
  %v258 = vrcp.pop %v256
  %v259 = vmul.f32 %v238, %v257
  %v260 = vmul.f32 %v239, %v258
  %v261 = vmax.f32 %v249, -2.0
  %v262 = vmax.f32 %v250, -2.0
  %v263 = vmin.f32 %v261, 2.0
  %v264 = vmin.f32 %v262, 2.0
  %265 = vst [vmem:[%s3] sm:$0xff] %v263
  %266 = vst [vmem:[%s3 + $0x8] sm:$0x3] %v264
  %v267 = vmax.f32 %v259, -2.0
  %v268 = vmax.f32 %v260, -2.0
  %v269 = vmin.f32 %v267, 2.0
  %v270 = vmin.f32 %v268, 2.0
  %271 = vst [vmem:[%s3 + $0x1c] sm:$0xfc] %v269
  %272 = vst [vmem:[%s3 + $0x24] sm:$0xf] %v270
  %v274 = vrot.slane %v206, 2
  %v276 = vmul.f32 %v191, %v274
  %v277 = vperm.slane %v206, 6
  %v278 = vmul.f32 %v185, %v277
  %v279 = vmul.f32 %v188, %v277
  %v280 = vmul.f32 %v203, %v215
  %vm282 = vcmask 1045504
  %v283 = vrot.slane %v229, 2
  %v284 = vrot.slane %v280, 2
  %v285 = vsel %vm282, %v283, %v284
  %v288 = vsub.f32 %v278, %v285
  %v289 = vsub.f32 %v279, %v284
  %v290 = vmul.f32 %v191, %v277
  %v291 = vmul.f32 %v206, %v215
  %v293 = vrot.slane %v291, 2
  %v294 = vsel %vm282, %v284, %v293
  %v297 = vsub.f32 %v279, %v294
  %v298 = vsub.f32 %v290, %v293
  %v299 = vand.u32 2147483647, %v288
  %v300 = vand.u32 2147483647, %v289
  %v301 = vperm.slane %v276, 4
  %v302 = vadd.f32 %v301, %v299
  %v303 = vadd.f32 %v301, %v300
  %v304 = vadd.f32 %v302, 0.01
  %v305 = vadd.f32 %v303, 0.01
  %v306 = vrcp.pop %v304
  %v307 = vrcp.pop %v305
  %v308 = vmul.f32 %v288, %v306
  %v309 = vmul.f32 %v289, %v307
  %v310 = vand.u32 2147483647, %v297
  %v311 = vand.u32 2147483647, %v298
  %v312 = vadd.f32 %v301, %v310
  %v313 = vadd.f32 %v301, %v311
  %v314 = vadd.f32 %v312, 0.01
  %v315 = vadd.f32 %v313, 0.01
  %v316 = vrcp.pop %v314
  %v317 = vrcp.pop %v315
  %v318 = vmul.f32 %v297, %v316
  %v319 = vmul.f32 %v298, %v317
  %v320 = vmax.f32 %v308, -2.0
  %v321 = vmax.f32 %v309, -2.0
  %v322 = vmin.f32 %v320, 2.0
  %v323 = vmin.f32 %v321, 2.0
  %324 = vst [vmem:[%s3 + $0xa] sm:$0xff] %v322
  %325 = vst [vmem:[%s3 + $0x12] sm:$0x3] %v323
  %v326 = vmax.f32 %v318, -2.0
  %v327 = vmax.f32 %v319, -2.0
  %v328 = vmin.f32 %v326, 2.0
  %v329 = vmin.f32 %v327, 2.0
  %330 = vst [vmem:[%s3 + $0x26] sm:$0xfc] %v328
  %331 = vst [vmem:[%s3 + $0x2e] sm:$0xf] %v329
  %v332 = vrot.slane %v206, 5
  %v334 = vmul.f32 %v200, %v332
  %v335 = vmul.f32 %v194, %v277
  %v336 = vmul.f32 %v200, %v212
  %v337 = vmul.f32 %v203, %v212
  %v340 = vrot.slane %v336, 5
  %v341 = vrot.slane %v337, 5
  %v342 = vsel %vm122, %v340, %v341
  %v345 = vsub.f32 %v290, %v340
  %v346 = vsub.f32 %v335, %v342
  %v347 = vmul.f32 %v197, %v277
  %v348 = vmul.f32 %v200, %v277
  %v349 = vmul.f32 %v206, %v212
  %v351 = vrot.slane %v349, 5
  %v352 = vsel %vm122, %v341, %v351
  %v356 = vsub.f32 %v335, %v341
  %v357 = vsub.f32 %v347, %v352
  %v358 = vsub.f32 %v348, %v351
  %v359 = vand.u32 2147483647, %v345
  %v360 = vand.u32 2147483647, %v346
  %v361 = vperm.slane %v334, 1
  %v362 = vadd.f32 %v361, %v359
  %v363 = vadd.f32 %v361, %v360
  %v364 = vadd.f32 %v362, 0.01
  %v365 = vadd.f32 %v363, 0.01
  %v366 = vrcp.pop %v364
  %v367 = vrcp.pop %v365
  %v368 = vmul.f32 %v345, %v366
  %v369 = vmul.f32 %v346, %v367
  %v370 = vand.u32 2147483647, %v356
  %v371 = vand.u32 2147483647, %v357
  %v372 = vand.u32 2147483647, %v358
  %v373 = vadd.f32 %v361, %v370
  %v374 = vadd.f32 %v361, %v371
  %v375 = vadd.f32 %v361, %v372
  %v376 = vadd.f32 %v373, 0.01
  %v377 = vadd.f32 %v374, 0.01
  %v378 = vadd.f32 %v375, 0.01
  %v379 = vrcp.pop %v376
  %v380 = vrcp.pop %v377
  %v381 = vrcp.pop %v378
  %v382 = vmul.f32 %v356, %v379
  %v383 = vmul.f32 %v357, %v380
  %v384 = vmul.f32 %v358, %v381
  %v385 = vmax.f32 %v368, -2.0
  %v386 = vmax.f32 %v369, -2.0
  %v387 = vmin.f32 %v385, 2.0
  %v388 = vmin.f32 %v386, 2.0
  %389 = vst [vmem:[%s3 + $0xf] sm:$0xe0] %v387
  %390 = vst [vmem:[%s3 + $0x17] sm:$0x7f] %v388
  %v391 = vmax.f32 %v382, -2.0
  %v392 = vmax.f32 %v383, -2.0
  %v393 = vmax.f32 %v384, -2.0
  %v394 = vmin.f32 %v391, 2.0
  %v395 = vmin.f32 %v392, 2.0
  %v396 = vmin.f32 %v393, 2.0
  %397 = vst [vmem:[%s3 + $0x2b] sm:$0x80] %v394
  %398 = vst [vmem:[%s3 + $0x33] sm:$0xff] %v395
  %399 = vst [vmem:[%s3 + $0x3b] sm:$0x1] %v396
  %400 = vst [vmem:[%s3 + $0x3c] sm:$0xf] 0.0
  // Predicated region
  $region14: #{crconv2d_forward.1} parent=0 // pred_check
    _
  $region15: #{crconv2d_forward.1} parent=0 // pred_check_branch
    %402 = sbr.rel (0) target = $region17
  $region16: #{crconv2d_forward.1} parent=0 // pred_region
    _
  $region17: #{crconv2d_forward.1} parent=0 // pred_fallthru
    _
  // Predicated region
  $region18: #{crconv2d_forward.1} parent=0 // pred_check
    _
  $region19: #{crconv2d_forward.1} parent=0 // pred_check_branch
    %404 = sbr.rel (0) target = $region21
  $region20: #{crconv2d_forward.1} parent=0 // pred_region
    _
  $region21: #{crconv2d_forward.1} parent=0 // pred_fallthru
    _

</llo_original>
